<compile_context>
chip_gen: v7x
topology: tpu7x:2x2x1
jax: 0.10.0
libtpu: 0.0.40
codegen_flags: <defaults>
</compile_context>

<pallas_src>
import functools
import math

import numpy as np
import jax
import jax.numpy as jnp
from jax.experimental import pallas as pl
from jax.experimental.pallas import tpu as pltpu

F32 = jnp.float32
BF16 = jnp.bfloat16

# Swin-tiny config
DEPTHS = (2, 2, 6, 2)
HEADS = (3, 6, 12, 24)
DIMS = (96, 192, 384, 768)
WINDOW = 8
PATCH = 4
IN_CH = 3

# Head config (SwinSeg defaults)
NUM_FEATURES = 128
NUM_LEVELS = 3
LEVEL_SIZE = NUM_FEATURES // NUM_LEVELS  # 42
SPP_GRIDS = (8, 4, 2, 1)


def _round_up(x, m):
    return (x + m - 1) // m * m


def _gelu(x):
    c = math.sqrt(2.0 / math.pi)
    return 0.5 * x * (1.0 + jnp.tanh(c * (x + 0.044715 * x * x * x)))


# ----------------------------------------------------------------------------
# Fused matmul kernel: [LN | BN+GELU prologue] -> bf16 MXU matmul -> bias ->
#                      [GELU epilogue] -> [residual add]
# ----------------------------------------------------------------------------
def _mm_kernel(*refs, prologue, apply_gelu, has_residual):
    idx = 0
    a = refs[idx][...]
    idx += 1
    if prologue == "ln":
        w = refs[idx][...]
        b = refs[idx + 1][...]
        idx += 2
        mean = jnp.mean(a, axis=-1, keepdims=True)
        var = jnp.mean((a - mean) ** 2, axis=-1, keepdims=True)
        a = (a - mean) * jax.lax.rsqrt(var + 1e-5) * w + b
    elif prologue == "bn_gelu":
        s = refs[idx][...]
        t = refs[idx + 1][...]
        idx += 2
        a = _gelu(a * s + t)
    wmat = refs[idx][...]
    idx += 1
    bias = refs[idx][...]
    idx += 1
    acc = jnp.dot(a.astype(BF16), wmat, preferred_element_type=jnp.float32)
    acc = acc + bias
    if apply_gelu:
        acc = _gelu(acc)
    if has_residual:
        acc = acc + refs[idx][...]
        idx += 1
    refs[idx][...] = acc


def _choose_tn(N):
    if N <= 512:
        return N
    for tn in (512, 384, 256, 128):
        if N % tn == 0:
            return tn
    return N


@functools.partial(jax.jit, static_argnames=("apply_gelu", "prologue"))
def pallas_matmul(a, b, bias=None, *, apply_gelu=False, prologue=None,
                  prologue_params=None, residual=None):
    """a:(M,K) @ b:(K,N)[bf16] + bias:(N,) -> (M,N) f32, with optional fused
    LayerNorm / BN+GELU prologue, GELU epilogue and residual add."""
    M, K = a.shape
    Kb, N = b.shape
    assert Kb == K
    if bias is None:
        bias = jnp.zeros((N,), F32)

    TM = min(256, _round_up(M, 8))  # 256 fills the 256x256 MXU on v6e/v7x (128 enough on v5e)
    TN = _choose_tn(N)
    Mp = _round_up(M, TM)

    b = b.astype(BF16)
    a_in = a.astype(F32) if prologue is not None else a.astype(BF16)
    if Mp != M:
        a_in = jnp.pad(a_in, ((0, Mp - M), (0, 0)))

    inputs = [a_in]
    in_specs = [pl.BlockSpec((TM, K), lambda i, j: (i, 0))]
    if prologue is not None:
        p0, p1 = prologue_params
        inputs += [p0.reshape(1, K).astype(F32), p1.reshape(1, K).astype(F32)]
        in_specs += [pl.BlockSpec((1, K), lambda i, j: (0, 0))] * 2
    inputs += [b, bias.reshape(1, N).astype(F32)]
    in_specs += [pl.BlockSpec((K, TN), lambda i, j: (0, j)),
                 pl.BlockSpec((1, TN), lambda i, j: (0, j))]
    if residual is not None:
        r = residual.astype(F32)
        if Mp != M:
            r = jnp.pad(r, ((0, Mp - M), (0, 0)))
        inputs.append(r)
        in_specs.append(pl.BlockSpec((TM, TN), lambda i, j: (i, j)))

    out = pl.pallas_call(
        functools.partial(_mm_kernel, prologue=prologue, apply_gelu=apply_gelu,
                          has_residual=residual is not None),
        out_shape=jax.ShapeDtypeStruct((Mp, N), F32),
        grid=(Mp // TM, N // TN),
        in_specs=in_specs,
        out_specs=pl.BlockSpec((TM, TN), lambda i, j: (i, j)),
        compiler_params=pltpu.CompilerParams(
            dimension_semantics=("parallel", "parallel")),
    )(*inputs)
    return out[:M] if Mp != M else out


# ----------------------------------------------------------------------------
# Row-tiled elementwise kernels (LayerNorm, folded-BN + GELU)
# ----------------------------------------------------------------------------
def _layernorm_kernel(x_ref, w_ref, b_ref, o_ref):
    x = x_ref[...]
    mean = jnp.mean(x, axis=-1, keepdims=True)
    var = jnp.mean((x - mean) ** 2, axis=-1, keepdims=True)
    o_ref[...] = (x - mean) * jax.lax.rsqrt(var + 1e-5) * w_ref[...] + b_ref[...]


@jax.jit
def pallas_layernorm(x, w, b):
    M, C = x.shape
    TM = min(512, _round_up(M, 8))
    Mp = _round_up(M, TM)
    x_p = jnp.pad(x.astype(F32), ((0, Mp - M), (0, 0))) if Mp != M else x.astype(F32)
    out = pl.pallas_call(
        _layernorm_kernel,
        out_shape=jax.ShapeDtypeStruct((Mp, C), F32),
        grid=(Mp // TM,),
        in_specs=[pl.BlockSpec((TM, C), lambda i: (i, 0)),
                  pl.BlockSpec((1, C), lambda i: (0, 0)),
                  pl.BlockSpec((1, C), lambda i: (0, 0))],
        out_specs=pl.BlockSpec((TM, C), lambda i: (i, 0)),
        compiler_params=pltpu.CompilerParams(dimension_semantics=("parallel",)),
    )(x_p, w.reshape(1, C).astype(F32), b.reshape(1, C).astype(F32))
    return out[:M] if Mp != M else out


def _bn_gelu_kernel(x_ref, s_ref, t_ref, o_ref):
    o_ref[...] = _gelu(x_ref[...] * s_ref[...] + t_ref[...])


@jax.jit
def pallas_bn_gelu(x, scale, shift):
    M, C = x.shape
    TM = min(512, _round_up(M, 8))
    Mp = _round_up(M, TM)
    x_p = jnp.pad(x.astype(F32), ((0, Mp - M), (0, 0))) if Mp != M else x.astype(F32)
    out = pl.pallas_call(
        _bn_gelu_kernel,
        out_shape=jax.ShapeDtypeStruct((Mp, C), F32),
        grid=(Mp // TM,),
        in_specs=[pl.BlockSpec((TM, C), lambda i: (i, 0)),
                  pl.BlockSpec((1, C), lambda i: (0, 0)),
                  pl.BlockSpec((1, C), lambda i: (0, 0))],
        out_specs=pl.BlockSpec((TM, C), lambda i: (i, 0)),
        compiler_params=pltpu.CompilerParams(dimension_semantics=("parallel",)),
    )(x_p, scale.reshape(1, C).astype(F32), shift.reshape(1, C).astype(F32))
    return out[:M] if Mp != M else out


# ----------------------------------------------------------------------------
# Window attention: WB windows per grid step, fused-qkv input, lane-dense output
# ----------------------------------------------------------------------------
def _window_attn_kernel(*refs, nH, Dh, scale, has_mask):
    if has_mask:
        qkv_ref, bias_ref, mask_ref, o_ref = refs
    else:
        qkv_ref, bias_ref, o_ref = refs
        mask_ref = None
    qkv = qkv_ref[...]            # (WB, N, 3C) bf16
    mask = mask_ref[...] if has_mask else None
    C = nH * Dh
    outs = []
    for h in range(nH):
        q = qkv[:, :, h * Dh:(h + 1) * Dh]
        k = qkv[:, :, C + h * Dh:C + (h + 1) * Dh]
        v = qkv[:, :, 2 * C + h * Dh:2 * C + (h + 1) * Dh]
        s = jax.lax.dot_general(
            q, k, (((2,), (2,)), ((0,), (0,))),
            preferred_element_type=jnp.float32) * scale      # (WB, N, N) f32
        s = s + bias_ref[h]
        if has_mask:
            s = s + mask
        s = s - jnp.max(s, axis=-1, keepdims=True)
        p = jnp.exp(s)
        p = p * pl.reciprocal(jnp.sum(p, axis=-1, keepdims=True), approx=True)
        ctx = jax.lax.dot_general(
            p.astype(BF16), v, (((2,), (1,)), ((0,), (0,))),
            preferred_element_type=jnp.float32)               # (WB, N, Dh)
        outs.append(ctx)
    o_ref[...] = jnp.concatenate(outs, axis=-1)               # (WB, N, C) lane-dense


def _choose_wb(BW, N, must_divide, row_limit=512):
    best = 1
    for cand in range(1, BW + 1):
        if BW % cand == 0 and must_divide % cand == 0 and cand * N <= row_limit:
            best = cand
    return best


@functools.partial(jax.jit, static_argnames=("nH",))
def pallas_window_attention(qkv, bias, mask, *, nH):
    """qkv:(BW,N,3C)  bias:(nH,N,N)  mask:(nW,N,N) or None  -> (BW,N,C) f32."""
    BW, N, threeC = qkv.shape
    C = threeC // 3
    Dh = C // nH
    scale = 1.0 / math.sqrt(Dh)
    has_mask = mask is not None
    must_divide = mask.shape[0] if has_mask else BW
    WB = _choose_wb(BW, N, must_divide)

    inputs = [qkv.astype(BF16), bias.astype(F32)]
    in_specs = [pl.BlockSpec((WB, N, threeC), lambda i: (i, 0, 0)),
                pl.BlockSpec((nH, N, N), lambda i: (0, 0, 0))]
    if has_mask:
        nblk = mask.shape[0] // WB
        inputs.append(mask.astype(F32))
        in_specs.append(pl.BlockSpec((WB, N, N), lambda i: (i % nblk, 0, 0)))

    out = pl.pallas_call(
        functools.partial(_window_attn_kernel, nH=nH, Dh=Dh, scale=scale,
                          has_mask=has_mask),
        out_shape=jax.ShapeDtypeStruct((BW, N, C), F32),
        grid=(BW // WB,),
        in_specs=in_specs,
        out_specs=pl.BlockSpec((WB, N, C), lambda i: (i, 0, 0)),
        compiler_params=pltpu.CompilerParams(dimension_semantics=("parallel",)),
    )(*inputs)
    return out


# ----------------------------------------------------------------------------
# Parameter generation (deterministic synthetic weights, packed for the kernels)
# ----------------------------------------------------------------------------
class ParamGen:
    def __init__(self, seed=0):
        self.key = jax.random.PRNGKey(seed)
        self.count = 0

    def normal(self, shape, std=0.02):
        self.count += 1
        k = jax.random.fold_in(self.key, self.count)
        return (std * jax.random.normal(k, shape, dtype=F32)).astype(F32)

    def zeros(self, shape):
        return jnp.zeros(shape, F32)

    def ones(self, shape):
        return jnp.ones(shape, F32)


def _effective_window(H, W, window):
    return min(window, H, W)


def relative_position_index(ws):
    coords = np.stack(np.meshgrid(np.arange(ws), np.arange(ws), indexing="ij"))
    cf = coords.reshape(2, -1)
    rel = (cf[:, :, None] - cf[:, None, :]).transpose(1, 2, 0).astype(np.int64)
    rel[:, :, 0] += ws - 1
    rel[:, :, 1] += ws - 1
    rel[:, :, 0] *= 2 * ws - 1
    return rel.sum(-1)  # (N, N)


def init_backbone_params(pg, img_size, window=WINDOW):
    P = {}
    P["patch_w"] = pg.normal((PATCH * PATCH * IN_CH, DIMS[0])).astype(BF16)
    P["patch_b"] = pg.zeros((DIMS[0],))
    P["embed_ln_w"] = pg.ones((DIMS[0],))
    P["embed_ln_b"] = pg.zeros((DIMS[0],))
    P["stages"] = []
    H = W = img_size // PATCH
    for s in range(4):
        C, nH, depth = DIMS[s], HEADS[s], DEPTHS[s]
        ws_eff = _effective_window(H, W, window)
        N = ws_eff * ws_eff
        rel_idx = relative_position_index(ws_eff)
        blocks = []
        for _ in range(depth):
            wq, wk, wv = pg.normal((C, C)), pg.normal((C, C)), pg.normal((C, C))
            rpb = pg.normal(((2 * ws_eff - 1) ** 2, nH))
            rel_bias = jnp.transpose(
                rpb[rel_idx.reshape(-1)].reshape(N, N, nH), (2, 0, 1)).astype(F32)
            blocks.append(dict(
                ln1_w=pg.ones((C,)), ln1_b=pg.zeros((C,)),
                wqkv=jnp.concatenate([wq, wk, wv], axis=1).astype(BF16),
                bqkv=pg.zeros((3 * C,)),
                wo=pg.normal((C, C)).astype(BF16), bo=pg.zeros((C,)),
                rel_bias=rel_bias,
                ln2_w=pg.ones((C,)), ln2_b=pg.zeros((C,)),
                fc1_w=pg.normal((C, 4 * C)).astype(BF16), fc1_b=pg.zeros((4 * C,)),
                fc2_w=pg.normal((4 * C, C)).astype(BF16), fc2_b=pg.zeros((C,)),
            ))
        stage = dict(blocks=blocks)
        if s < 3:
            stage["merge_ln_w"] = pg.ones((4 * C,))
            stage["merge_ln_b"] = pg.zeros((4 * C,))
            stage["merge_w"] = pg.normal((4 * C, 2 * C)).astype(BF16)
            H, W = H // 2, W // 2
        P["stages"].append(stage)
    return P


def init_head_params(pg):
    def conv_block(Cin, Cout, k):
        gamma, beta = pg.ones((Cin,)), pg.zeros((Cin,))
        mean, var = pg.zeros((Cin,)), pg.ones((Cin,))
        scale = gamma * jax.lax.rsqrt(var + 1e-5)          # folded eval-mode BN
        shift = beta - mean * scale
        w = pg.normal((k, k, Cin, Cout)).reshape(k * k * Cin, Cout).astype(BF16)
        return dict(bn_scale=scale, bn_shift=shift, w=w)

    spp = dict(
        bn_conv=conv_block(DIMS[-1], NUM_FEATURES, 1),
        levels=[conv_block(NUM_FEATURES, LEVEL_SIZE, 1) for _ in range(NUM_LEVELS)],
        fuse=conv_block(NUM_FEATURES + NUM_LEVELS * LEVEL_SIZE, NUM_FEATURES, 1),
    )
    ups = []
    for skip_ch in (DIMS[2], DIMS[1], DIMS[0]):  # reversed order, as in the module
        ups.append(dict(
            bottleneck=conv_block(skip_ch, NUM_FEATURES, 1),
            blend=conv_block(NUM_FEATURES, NUM_FEATURES, 3),
        ))
    return spp, ups


# ----------------------------------------------------------------------------
# Glue helpers (reshapes / static interpolation matrices)
# ----------------------------------------------------------------------------
def window_partition(x, ws):
    B, H, W, C = x.shape
    x = x.reshape(B, H // ws, ws, W // ws, ws, C)
    x = jnp.transpose(x, (0, 1, 3, 2, 4, 5))
    return x.reshape(B * (H // ws) * (W // ws), ws * ws, C)


def window_reverse(windows, ws, H, W):
    C = windows.shape[-1]
    B = windows.shape[0] // ((H // ws) * (W // ws))
    x = windows.reshape(B, H // ws, W // ws, ws, ws, C)
    x = jnp.transpose(x, (0, 1, 3, 2, 4, 5))
    return x.reshape(B, H, W, C)


def shift_attn_mask(H, W, ws, shift):
    img = np.zeros((1, H, W, 1), np.float32)
    cnt = 0
    for hs in (slice(0, -ws), slice(-ws, -shift), slice(-shift, None)):
        for wsl in (slice(0, -ws), slice(-ws, -shift), slice(-shift, None)):
            img[:, hs, wsl, :] = cnt
            cnt += 1
    m = img.reshape(1, H // ws, ws, W // ws, ws, 1).transpose(0, 1, 3, 2, 4, 5).reshape(-1, ws * ws)
    attn = m[:, None, :] - m[:, :, None]
    attn = np.where(attn != 0, -100.0, 0.0).astype(np.float32)
    return jnp.asarray(attn)  # (nW, N, N)


def _adaptive_pool_matrix(in_size, out_size):
    P = np.zeros((out_size, in_size), np.float32)
    for i in range(out_size):
        s = int(np.floor(i * in_size / out_size))
        e = int(np.ceil((i + 1) * in_size / out_size))
        P[i, s:e] = 1.0 / (e - s)
    return jnp.asarray(P)


def adaptive_avg_pool_nhwc(x, out_h, out_w):
    _, H, W, _ = x.shape
    Ph = _adaptive_pool_matrix(H, out_h)
    Pw = _adaptive_pool_matrix(W, out_w)
    y = jnp.einsum("oh,bhwc->bowc", Ph, x)
    return jnp.einsum("ow,bhwc->bhoc", Pw, y)


def _bilinear_matrix(in_size, out_size):
    # matches F.interpolate(mode='bilinear', align_corners=False)
    M = np.zeros((out_size, in_size), np.float32)
    if in_size == 1:
        M[:, 0] = 1.0
        return jnp.asarray(M)
    scale = in_size / out_size
    for i in range(out_size):
        src = max((i + 0.5) * scale - 0.5, 0.0)
        i0 = min(int(np.floor(src)), in_size - 1)
        i1 = min(i0 + 1, in_size - 1)
        w1 = src - i0
        M[i, i0] += 1.0 - w1
        M[i, i1] += w1
    return jnp.asarray(M)


def bilinear_resize_nhwc(x, out_h, out_w):
    _, H, W, _ = x.shape
    Mh = _bilinear_matrix(H, out_h)
    Mw = _bilinear_matrix(W, out_w)
    y = jnp.einsum("oh,bhwc->bowc", Mh, x)
    return jnp.einsum("ow,bhwc->bhoc", Mw, y)


# ----------------------------------------------------------------------------
# Head blocks: BN(eval) -> GELU -> Conv (no bias); BN+GELU fused into the matmul
# prologue for 1x1 convs, standalone (tiled) for the 3x3 im2col path.
# ----------------------------------------------------------------------------
def bn_gelu_conv(x, p):
    B, H, W, Cin = x.shape
    Cout = p["w"].shape[1]
    k = int(round(math.sqrt(p["w"].shape[0] // Cin)))
    if k == 1:
        out = pallas_matmul(x.reshape(B * H * W, Cin), p["w"],
                            prologue="bn_gelu",
                            prologue_params=(p["bn_scale"], p["bn_shift"]))
        return out.reshape(B, H, W, Cout)
    # 3x3: BN+GELU first (the zero padding of the conv applies post-activation)
    y = pallas_bn_gelu(x.reshape(B * H * W, Cin), p["bn_scale"], p["bn_shift"])
    y = y.reshape(B, H, W, Cin)
    pad = k // 2
    yp = jnp.pad(y, ((0, 0), (pad, pad), (pad, pad), (0, 0)))
    patches = [yp[:, dh:dh + H, dw:dw + W, :] for dh in range(k) for dw in range(k)]
    cols = jnp.concatenate(patches, axis=-1).reshape(B * H * W, k * k * Cin)
    out = pallas_matmul(cols, p["w"])
    return out.reshape(B, H, W, Cout)


@jax.jit
def spp_forward(x, P):  # x: (B, h, w, 768) NHWC
    _, h, w, _ = x.shape
    ar = w / h
    x = bn_gelu_conv(x, P["bn_conv"])
    levels = [x]
    for i, g in enumerate(SPP_GRIDS[:NUM_LEVELS]):
        gh = g
        gw = max(1, int(round(ar * g)))
        pooled = adaptive_avg_pool_nhwc(x, gh, gw)
        lvl = bn_gelu_conv(pooled, P["levels"][i])
        lvl = bilinear_resize_nhwc(lvl, h, w)
        levels.append(lvl)
    cat = jnp.concatenate(levels, axis=-1)
    return bn_gelu_conv(cat, P["fuse"])


@jax.jit
def upsample_forward(x, skip, P):  # NHWC
    skip = bn_gelu_conv(skip, P["bottleneck"])
    _, sh, sw, _ = skip.shape
    x = bilinear_resize_nhwc(x, sh, sw)
    x = x + skip
    return bn_gelu_conv(x, P["blend"])


# ----------------------------------------------------------------------------
# Swin backbone forward
# ----------------------------------------------------------------------------
@functools.partial(jax.jit, static_argnames=("H", "W", "nH", "ws", "shift"))
def swin_block(x, blk, *, H, W, nH, ws, shift):
    B, L, C = x.shape
    shortcut = x
    # fused LN1 + QKV projection (single (C, 3C) matmul)
    qkv = pallas_matmul(x.reshape(B * L, C), blk["wqkv"], blk["bqkv"],
                        prologue="ln", prologue_params=(blk["ln1_w"], blk["ln1_b"]))
    qkv = qkv.reshape(B, H, W, 3 * C)
    if shift > 0:
        qkv = jnp.roll(qkv, shift=(-shift, -shift), axis=(1, 2))
    win = window_partition(qkv, ws)               # (BW, N, 3C)
    BW, N, _ = win.shape

    mask = shift_attn_mask(H, W, ws, shift) if shift > 0 else None
    ctx = pallas_window_attention(win, blk["rel_bias"], mask, nH=nH)  # (BW, N, C)
    attn_out = pallas_matmul(ctx.reshape(BW * N, C), blk["wo"], blk["bo"])
    h = window_reverse(attn_out.reshape(BW, N, C), ws, H, W)
    if shift > 0:
        h = jnp.roll(h, shift=(shift, shift), axis=(1, 2))
    x = shortcut + h.reshape(B, L, C)

    # MLP: fused LN2 + fc1 + GELU, then fc2 with fused residual add
    y = pallas_matmul(x.reshape(B * L, C), blk["fc1_w"], blk["fc1_b"],
                      apply_gelu=True, prologue="ln",
                      prologue_params=(blk["ln2_w"], blk["ln2_b"]))
    y = pallas_matmul(y, blk["fc2_w"], blk["fc2_b"], residual=x.reshape(B * L, C))
    return y.reshape(B, L, C)


@functools.partial(jax.jit, static_argnames=("H", "W"))
def patch_merging(x, stage, *, H, W):
    B, L, C = x.shape
    x = x.reshape(B, H, W, C)
    f0 = x[:, 0::2, 0::2, :]
    f1 = x[:, 1::2, 0::2, :]
    f2 = x[:, 0::2, 1::2, :]
    f3 = x[:, 1::2, 1::2, :]
    x = jnp.concatenate([f0, f1, f2, f3], axis=-1).reshape(B * (H // 2) * (W // 2), 4 * C)
    # fused LN + reduction linear (no bias)
    y = pallas_matmul(x, stage["merge_w"], prologue="ln",
                      prologue_params=(stage["merge_ln_w"], stage["merge_ln_b"]))
    return y.reshape(B, (H // 2) * (W // 2), 2 * C)


def swin_backbone_forward(x_nchw, P):
    """Returns the 5 reshaped_hidden_states as NCHW feature maps."""
    B = x_nchw.shape[0]
    x = jnp.transpose(x_nchw, (0, 2, 3, 1))  # NHWC
    H, W = x.shape[1] // PATCH, x.shape[2] // PATCH

    # patch embedding (4x4 conv, stride 4) as matmul + tiled LayerNorm
    x = x.reshape(B, H, PATCH, W, PATCH, IN_CH)
    x = jnp.transpose(x, (0, 1, 3, 2, 4, 5)).reshape(B * H * W, PATCH * PATCH * IN_CH)
    tokens = pallas_matmul(x, P["patch_w"], P["patch_b"])
    tokens = pallas_layernorm(tokens, P["embed_ln_w"], P["embed_ln_b"])
    tokens = tokens.reshape(B, H * W, DIMS[0])

    def to_nchw(t, h, w):
        return jnp.transpose(t.reshape(B, h, w, t.shape[-1]), (0, 3, 1, 2))

    feats = [to_nchw(tokens, H, W)]
    for s in range(4):
        nH, depth = HEADS[s], DEPTHS[s]
        ws_eff = _effective_window(H, W, WINDOW)
        if min(H, W) <= WINDOW:
            shifts = [0] * depth
        else:
            shifts = [0 if (b % 2 == 0) else WINDOW // 2 for b in range(depth)]
        for b in range(depth):
            tokens = swin_block(tokens, P["stages"][s]["blocks"][b],
                                H=H, W=W, nH=nH, ws=ws_eff, shift=shifts[b])
        if s < 3:
            tokens = patch_merging(tokens, P["stages"][s], H=H, W=W)
            H, W = H // 2, W // 2
        feats.append(to_nchw(tokens, H, W))
    return feats  # [96@/4, 192@/8, 384@/16, 768@/32, 768@/32]


# ----------------------------------------------------------------------------
# SwinSeg forward
# ----------------------------------------------------------------------------
def swinseg_forward(batch_nchw, params):
    feats_nchw = swin_backbone_forward(batch_nchw, params["backbone"])
    x = [jnp.transpose(f, (0, 2, 3, 1)) for f in feats_nchw]  # NHWC for the head
    spp_input, features = x[-1], list(x[:-2])
    spp_out = spp_forward(spp_input, params["spp"])
    features.append(spp_out)

    # forward_up
    features = features[::-1]
    cur = features[0]
    upsamples = []
    for skip, up_p in zip(features[1:], params["upsamples"]):
        cur = upsample_forward(cur, skip, up_p)
        upsamples.append(cur)

    to_nchw = lambda t: jnp.transpose(t, (0, 3, 1, 2))
    return to_nchw(cur), [to_nchw(u) for u in upsamples]


if __name__ == "__main__":
    IMG = 64  # small image; feature pyramid 16/8/4/2
    pg = ParamGen(0)
    backbone_params = init_backbone_params(pg, IMG, WINDOW)
    spp_params, up_params = init_head_params(pg)
    params = dict(backbone=backbone_params, spp=spp_params, upsamples=up_params)

    key = jax.random.PRNGKey(0)
    batch = jax.random.normal(key, (2, IN_CH, IMG, IMG), dtype=jnp.float32)  # NCHW

    prelogits, upsamples = swinseg_forward(batch, params)
    prelogits = jax.block_until_ready(prelogits)
    upsamples = [jax.block_until_ready(u) for u in upsamples]

    assert prelogits.shape == (2, NUM_FEATURES, IMG // 4, IMG // 4), prelogits.shape
    assert [tuple(u.shape) for u in upsamples] == [
        (2, NUM_FEATURES, IMG // 16, IMG // 16),
        (2, NUM_FEATURES, IMG // 8, IMG // 8),
        (2, NUM_FEATURES, IMG // 4, IMG // 4),
    ]
    assert bool(jnp.all(jnp.isfinite(prelogits)))
    print("KERNEL_OK")
</pallas_src>

<mosaic_0001>
module attributes {stable_mosaic.version = 11 : i64} {
  func.func @_mm_kernel(%arg0: i32, %arg1: i32, %arg2: memref<256x48xbf16, #tpu.memory_space<vmem>>, %arg3: memref<48x96xbf16, #tpu.memory_space<vmem>>, %arg4: memref<1x96xf32, #tpu.memory_space<vmem>>, %arg5: memref<256x96xf32, #tpu.memory_space<vmem>>) attributes {dimension_semantics = [#tpu.dimension_semantics<parallel>, #tpu.dimension_semantics<parallel>], iteration_bounds = array<i64: 2, 1>, scalar_prefetch = 0 : i64, scratch_operands = 0 : i64, tpu.core_type = #tpu.core_type<tc>, window_params = [{transform_indices = @transform_0, window_bounds = array<i64: 256, 48>}, {transform_indices = @transform_1, window_bounds = array<i64: 48, 96>}, {transform_indices = @transform_2, window_bounds = array<i64: 1, 96>}, {transform_indices = @transform_3, window_bounds = array<i64: 256, 96>}]} {
    %c0 = arith.constant 0 : index
    %c0_0 = arith.constant 0 : index
    %0 = vector.load %arg2[%c0, %c0_0] : memref<256x48xbf16, #tpu.memory_space<vmem>>, vector<256x48xbf16>
    %c0_1 = arith.constant 0 : index
    %c0_2 = arith.constant 0 : index
    %1 = vector.load %arg3[%c0_1, %c0_2] : memref<48x96xbf16, #tpu.memory_space<vmem>>, vector<48x96xbf16>
    %c0_3 = arith.constant 0 : index
    %c0_4 = arith.constant 0 : index
    %2 = vector.load %arg4[%c0_3, %c0_4] : memref<1x96xf32, #tpu.memory_space<vmem>>, vector<1x96xf32>
    %cst = arith.constant dense<0.000000e+00> : vector<256x96xf32>
    %3 = tpu.matmul %0, %1, %cst {dimension_numbers = #tpu.dot_dimension_numbers<[1], [0], [0], [1], [0, 0, 1, 1], [], []>} : vector<256x48xbf16>, vector<48x96xbf16>, vector<256x96xf32> -> vector<256x96xf32>
    %4 = vector.broadcast %2 : vector<1x96xf32> to vector<256x96xf32>
    %5 = arith.addf %3, %4 : vector<256x96xf32>
    %c0_5 = arith.constant 0 : index
    %c0_6 = arith.constant 0 : index
    %6 = vector.load %arg5[%c0_5, %c0_6] : memref<256x96xf32, #tpu.memory_space<vmem>>, vector<256x96xf32>
    tpu.vector_store %arg5[%c0_5, %c0_6], %5 {strides = array<i32>} : memref<256x96xf32, #tpu.memory_space<vmem>>, vector<256x96xf32>,
    return
  }
  func.func @transform_0(%arg0: i32, %arg1: i32) -> (i32, i32) {
    %c0_i32 = arith.constant 0 : i32
    %c0_i32_0 = arith.constant 0 : i32
    return %arg0, %c0_i32 : i32, i32
  }
  func.func @transform_1(%arg0: i32, %arg1: i32) -> (i32, i32) {
    %c0_i32 = arith.constant 0 : i32
    %c0_i32_0 = arith.constant 0 : i32
    return %c0_i32, %arg1 : i32, i32
  }
  func.func @transform_2(%arg0: i32, %arg1: i32) -> (i32, i32) {
    %c0_i32 = arith.constant 0 : i32
    %c0_i32_0 = arith.constant 0 : i32
    return %c0_i32, %arg1 : i32, i32
  }
  func.func @transform_3(%arg0: i32, %arg1: i32) -> (i32, i32) {
    %c0_i32 = arith.constant 0 : i32
    return %arg0, %arg1 : i32, i32
  }
}

</mosaic_0001>

<llo_original>
// kernel: pallas_matmul.1
$region0: #{pallas_matmul.1}
  #allocation0 [shape = 'u32[]', space=smem, size = 0x4, offset = 0x4, fixed_abs, tag = 'smem constant byte address 0x4 - core index']
  #allocation1 [shape = 'u32[144,128]{1,0:T(1,128)}', space=vmem, size = 0x12000, scoped, tag = 'internal scratch']
  %s0 = inlined_call_operand.vmem [shape: bf16[512,48], index: 0, kind: input, shape index: {}]
  %s1 = inlined_call_operand.vmem [shape: bf16[48,96], index: 1, kind: input, shape index: {}]
  %s2 = inlined_call_operand.vmem [shape: f32[1,96], index: 2, kind: input, shape index: {}]
  %s3 = inlined_call_operand.vmem [shape: f32[512,96], index: 3, kind: output, shape index: {}]
  %s4 = sld [smem:[#allocation0]]
  $region45: #{pallas_matmul.1} parent=0
    _
  %s6 = ssub.s32 1, %s4
  %s7 = scalar_select 0, %s6, %s4
  loop: start=0, step=1, limit=4
  $region2: #{pallas_matmul.1} parent=0 // loop_pre_header
    _
  $region3: #{pallas_matmul.1} parent=0 // loop_header
    %s9 = sphi 0, %s13
    %p10 = scmp.ge.s32.totalorder %s9, 4
    %s16 = sphi 0, %s28
    %s17 = sphi 0, %s24
    %s18 = sphi 0, %s16
    %s19 = sphi 0, %s17
    %s20 = sphi 0, %s18
    %s21 = sphi 0, %s19
    %s31 = sphi 0, %s33
    %s34 = sphi 0, %s31
    %s35 = sphi 0, %s34
    %s51 = sphi 0, %s35
    %s57 = sphi 0, %s59
    %s60 = sphi 0, %s57
    %s61 = sphi 0, %s60
    %s77 = sphi 0, %s61
    %s83 = sphi 0, %s85
    %s86 = sphi 0, %s83
    %s87 = sphi 0, %s86
    %s103 = sphi 0, %s87
    %s111 = sphi 0, %s113
    %s114 = sphi 0, %s111
    %s115 = sphi 0, %s114
    %s131 = sphi 0, %s115
  $region4: #{pallas_matmul.1} parent=0 // loop_header_branch
    %12 = sbr.rel (%p10) target = $region8
  $region5: #{pallas_matmul.1} parent=0 // loop_body
    %s14 = ssub.s32 %s9, 1
    %s15 = ssub.s32 %s9, 2
    %s22 = sadd.s32 1, %s17
    %p23 = scmp.ge.s32.totalorder %s22, 1
    %s24 = scalar_select %p23, 0, %s22
    %s25 = sadd.s32 1, %s16
    %s26 = scalar_select %p23, %s25, %s16
    %p27 = scmp.ge.s32.totalorder %s26, 2
    %s28 = scalar_select %p27, 0, %s26
    %s29 = ssub.s32 %s16, %s28
    %p30 = scmp.eq.s32.totalorder %s29, 0
    %s32 = sadd.s32 %s31, 1
    %s33 = scalar_select %p30, %s31, %s32
    %p36 = pneg %p30
    %p37 = scmp.eq.s32.totalorder %s9, 1
    %p38 = por %p36, %p37
    %p39 = scmp.ne.s32.totalorder %s31, %s34
    %p40 = scmp.eq.s32.totalorder %s9, 0
    %p41 = por %p39, %p40
    %p42 = scmp.ne.s32.totalorder %s31, %s34
    %p43 = scmp.eq.s32.totalorder %s14, 1
    %p44 = por %p42, %p43
    %p45 = scmp.ne.s32.totalorder %s34, %s35
    %p46 = scmp.eq.s32.totalorder %s14, 0
    %p47 = por %p45, %p46
    %p48 = scmp.ne.s32.totalorder %s34, %s35
    %p49 = scmp.eq.s32.totalorder %s15, 1
    %p50 = por %p48, %p49
    %p52 = scmp.ne.s32.totalorder %s35, %s51
    %p53 = scmp.eq.s32.totalorder %s15, 0
    %p54 = por %p52, %p53
    %s55 = ssub.s32 %s17, %s24
    %p56 = scmp.eq.s32.totalorder %s55, 0
    %s58 = sadd.s32 %s57, 1
    %s59 = scalar_select %p56, %s57, %s58
    %p62 = pneg %p56
    %p63 = scmp.eq.s32.totalorder %s9, 1
    %p64 = por %p62, %p63
    %p65 = scmp.ne.s32.totalorder %s57, %s60
    %p66 = scmp.eq.s32.totalorder %s9, 0
    %p67 = por %p65, %p66
    %p68 = scmp.ne.s32.totalorder %s57, %s60
    %p69 = scmp.eq.s32.totalorder %s14, 1
    %p70 = por %p68, %p69
    %p71 = scmp.ne.s32.totalorder %s60, %s61
    %p72 = scmp.eq.s32.totalorder %s14, 0
    %p73 = por %p71, %p72
    %p74 = scmp.ne.s32.totalorder %s60, %s61
    %p75 = scmp.eq.s32.totalorder %s15, 1
    %p76 = por %p74, %p75
    %p78 = scmp.ne.s32.totalorder %s61, %s77
    %p79 = scmp.eq.s32.totalorder %s15, 0
    %p80 = por %p78, %p79
    %s81 = ssub.s32 %s17, %s24
    %p82 = scmp.eq.s32.totalorder %s81, 0
    %s84 = sadd.s32 %s83, 1
    %s85 = scalar_select %p82, %s83, %s84
    %p88 = pneg %p82
    %p89 = scmp.eq.s32.totalorder %s9, 1
    %p90 = por %p88, %p89
    %p91 = scmp.ne.s32.totalorder %s83, %s86
    %p92 = scmp.eq.s32.totalorder %s9, 0
    %p93 = por %p91, %p92
    %p94 = scmp.ne.s32.totalorder %s83, %s86
    %p95 = scmp.eq.s32.totalorder %s14, 1
    %p96 = por %p94, %p95
    %p97 = scmp.ne.s32.totalorder %s86, %s87
    %p98 = scmp.eq.s32.totalorder %s14, 0
    %p99 = por %p97, %p98
    %p100 = scmp.ne.s32.totalorder %s86, %s87
    %p101 = scmp.eq.s32.totalorder %s15, 1
    %p102 = por %p100, %p101
    %p104 = scmp.ne.s32.totalorder %s87, %s103
    %p105 = scmp.eq.s32.totalorder %s15, 0
    %p106 = por %p104, %p105
    %s107 = ssub.s32 %s16, %s28
    %s108 = ssub.s32 %s17, %s24
    %s109 = sor.u32 %s107, %s108
    %p110 = scmp.eq.s32.totalorder %s109, 0
    %s112 = sadd.s32 %s111, 1
    %s113 = scalar_select %p110, %s111, %s112
    %p116 = pneg %p110
    %p117 = scmp.eq.s32.totalorder %s9, 1
    %p118 = por %p116, %p117
    %p119 = scmp.ne.s32.totalorder %s111, %s114
    %p120 = scmp.eq.s32.totalorder %s9, 0
    %p121 = por %p119, %p120
    %p122 = scmp.ne.s32.totalorder %s111, %s114
    %p123 = scmp.eq.s32.totalorder %s14, 1
    %p124 = por %p122, %p123
    %p125 = scmp.ne.s32.totalorder %s114, %s115
    %p126 = scmp.eq.s32.totalorder %s14, 0
    %p127 = por %p125, %p126
    %p128 = scmp.ne.s32.totalorder %s114, %s115
    %p129 = scmp.eq.s32.totalorder %s15, 1
    %p130 = por %p128, %p129
    %p132 = scmp.ne.s32.totalorder %s115, %s131
    %p133 = scmp.eq.s32.totalorder %s15, 0
    %p134 = por %p132, %p133
    %p135 = scmp.le.s32.totalorder 1, %s9
    %p136 = scmp.lt.s32.totalorder %s9, 3
    %p137 = pnand %p135, %p136
    %p138 = pneg %p137
    // Predicated region
    $region9: #{pallas_matmul.1} parent=5 // pred_check
      _
    $region10: #{pallas_matmul.1} parent=5 // pred_check_branch
      %140 = sbr.rel (%p137) target = $region12
    $region11: #{pallas_matmul.1} parent=5 // pred_region
      %s141 = ssub.s32 %s9, 1
      // Predicated region
      $region13: #{pallas_matmul.1} parent=11 // pred_check
        %p142 = pneg %p73
      $region14: #{pallas_matmul.1} parent=11 // pred_check_branch
        %144 = sbr.rel (%p142) target = $region16
      $region15: #{pallas_matmul.1} parent=11 // pred_region
        %p145 = scmp.lt.s32.totalorder %s19, 0
        %s146 = scalar_select %p145, %s19, 0
        %s147 = smul.addr %s146, 4
        %s148 = scalar_lea.vmem %s1, %s147
      $region16: #{pallas_matmul.1} parent=11 // pred_fallthru
        _
      // Predicated region
      $region17: #{pallas_matmul.1} parent=11 // pred_check
        %p149 = pneg %p99
      $region18: #{pallas_matmul.1} parent=11 // pred_check_branch
        %151 = sbr.rel (%p149) target = $region20
      $region19: #{pallas_matmul.1} parent=11 // pred_region
        %p152 = scmp.lt.s32.totalorder %s19, 0
        %s153 = scalar_select %p152, %s19, 0
        %s154 = scalar_lea.vmem %s2, %s153
      $region20: #{pallas_matmul.1} parent=11 // pred_fallthru
        _
    $region12: #{pallas_matmul.1} parent=5 // pred_fallthru
      _
    %p155 = scmp.lt.s32.totalorder %s9, 2
    // Predicated region
    $region21: #{pallas_matmul.1} parent=5 // pred_check
      %p156 = pneg %p155
    $region22: #{pallas_matmul.1} parent=5 // pred_check_branch
      %158 = sbr.rel (%p156) target = $region24
    $region23: #{pallas_matmul.1} parent=5 // pred_region
      // Predicated region
      $region25: #{pallas_matmul.1} parent=23 // pred_check
        %p159 = pneg %p41
      $region26: #{pallas_matmul.1} parent=23 // pred_check_branch
        %161 = sbr.rel (%p159) target = $region28
      $region27: #{pallas_matmul.1} parent=23 // pred_region
        %s162 = smul.u32 32, %s16
        %p163 = scmp.lt.s32.totalorder %s162, 63
        %s164 = scalar_select %p163, %s162, 63
        %s165 = smul.addr %s164, 4
        %s166 = scalar_lea.vmem %s0, %s165
        %s167 = smul.u32 32, %s16
      $region28: #{pallas_matmul.1} parent=23 // pred_fallthru
        _
    $region24: #{pallas_matmul.1} parent=5 // pred_fallthru
      _
    %p168 = scmp.le.s32.totalorder 1, %s9
    %p169 = scmp.lt.s32.totalorder %s9, 3
    %p170 = pnand %p168, %p169
    %p171 = pneg %p170
    // Predicated region
    $region29: #{pallas_matmul.1} parent=5 // pred_check
      _
    $region30: #{pallas_matmul.1} parent=5 // pred_check_branch
      %173 = sbr.rel (%p170) target = $region32
    $region31: #{pallas_matmul.1} parent=5 // pred_region
      %s174 = ssub.s32 %s9, 1
      %s175 = smul.u32 32, %s18
      %p176 = scmp.lt.s32.totalorder %s175, 63
      %s177 = scalar_select %p176, %s175, 63
      %s178 = smul.addr %s177, 4
      %s179 = scalar_lea.vmem %s0, %s178
      %p180 = pneg %p47
      %p181 = pneg %p44
      %p182 = scmp.lt.s32.totalorder %s19, 0
      %s183 = scalar_select %p182, %s19, 0
      %s184 = smul.addr %s183, 4
      %s185 = scalar_lea.vmem %s1, %s184
      %p186 = pneg %p73
      %p187 = pneg %p70
      %p188 = scmp.lt.s32.totalorder %s19, 0
      %s189 = scalar_select %p188, %s19, 0
      %s190 = scalar_lea.vmem %s2, %s189
      %p191 = pneg %p99
      %p192 = pneg %p96
      %p193 = pneg %p127
      %p194 = pneg %p124
      %s195 = smul.u32 32, %s18
      %p196 = scmp.lt.s32.totalorder %s195, 63
      %s197 = scalar_select %p196, %s195, 63
      %p198 = scmp.lt.s32.totalorder %s19, 0
      %s199 = scalar_select %p198, %s19, 0
      %s200 = sadd.s32 %s199, %s197
      %s201 = smul.addr %s200, 8
      %s202 = scalar_lea.vmem %s3, %s201
      %s203 = smul.u32 32, %s18
      %p204 = scmp.lt.s32.totalorder %s203, 63
      %s205 = scalar_select %p204, %s203, 63
      %s206 = smul.addr %s205, 4
      %s207 = scalar_lea.vmem %s0, %s206
      %s208 = smul.u32 32, %s18
      %p209 = scmp.lt.s32.totalorder %s19, 0
      %s210 = scalar_select %p209, %s19, 0
      %s211 = smul.addr %s210, 4
      %s212 = scalar_lea.vmem %s1, %s211
      %p213 = scmp.lt.s32.totalorder %s19, 0
      %s214 = scalar_select %p213, %s19, 0
      %s215 = scalar_lea.vmem %s2, %s214
      %s216 = smul.u32 32, %s18
      %p217 = scmp.lt.s32.totalorder %s216, 63
      %s218 = scalar_select %p217, %s216, 63
      %p219 = scmp.lt.s32.totalorder %s19, 0
      %s220 = scalar_select %p219, %s19, 0
      %s221 = sadd.s32 %s220, %s218
      %s222 = smul.addr %s221, 8
      %s223 = scalar_lea.vmem %s3, %s222
      %s224 = smul.u32 32, %s18
      %v226 = vld [vmem:[%s207] sm:$0xf]
      %v227 = vld [vmem:[%s207 + $0x4] sm:$0xf]
      %v228 = vld [vmem:[%s207 + $0x8] sm:$0xf]
      %v229 = vld [vmem:[%s207 + $0xc] sm:$0xf]
      %v230 = vld [vmem:[%s207 + $0x10] sm:$0xf]
      %v231 = vld [vmem:[%s207 + $0x14] sm:$0xf]
      %v232 = vld [vmem:[%s207 + $0x18] sm:$0xf]
      %v233 = vld [vmem:[%s207 + $0x1c] sm:$0xf]
      %v234 = vld [vmem:[%s207 + $0x20] sm:$0xf]
      %v235 = vld [vmem:[%s207 + $0x24] sm:$0xf]
      %v236 = vld [vmem:[%s207 + $0x28] sm:$0xf]
      %v237 = vld [vmem:[%s207 + $0x2c] sm:$0xf]
      %v238 = vld [vmem:[%s207 + $0x30] sm:$0xf]
      %v239 = vld [vmem:[%s207 + $0x34] sm:$0xf]
      %v240 = vld [vmem:[%s207 + $0x38] sm:$0xf]
      %v241 = vld [vmem:[%s207 + $0x3c] sm:$0xf]
      %v242 = vld [vmem:[%s207 + $0x40] sm:$0xf]
      %v243 = vld [vmem:[%s207 + $0x44] sm:$0xf]
      %v244 = vld [vmem:[%s207 + $0x48] sm:$0xf]
      %v245 = vld [vmem:[%s207 + $0x4c] sm:$0xf]
      %v246 = vld [vmem:[%s207 + $0x50] sm:$0xf]
      %v247 = vld [vmem:[%s207 + $0x54] sm:$0xf]
      %v248 = vld [vmem:[%s207 + $0x58] sm:$0xf]
      %v249 = vld [vmem:[%s207 + $0x5c] sm:$0xf]
      %v250 = vld [vmem:[%s207 + $0x60] sm:$0xf]
      %v251 = vld [vmem:[%s207 + $0x64] sm:$0xf]
      %v252 = vld [vmem:[%s207 + $0x68] sm:$0xf]
      %v253 = vld [vmem:[%s207 + $0x6c] sm:$0xf]
      %v254 = vld [vmem:[%s207 + $0x70] sm:$0xf]
      %v255 = vld [vmem:[%s207 + $0x74] sm:$0xf]
      %v256 = vld [vmem:[%s207 + $0x78] sm:$0xf]
      %v257 = vld [vmem:[%s207 + $0x7c] sm:$0xf]
      %v258 = vld [vmem:[%s212] sm:$0xf]
      %v259 = vld [vmem:[%s212 + $0x4] sm:$0xf]
      %v260 = vld [vmem:[%s212 + $0x8] sm:$0xf]
      %v261 = vld [vmem:[%s212 + $0xc] sm:$0xf]
      %v262 = vld [vmem:[%s212 + $0x10] sm:$0xf]
      %v263 = vld [vmem:[%s212 + $0x14] sm:$0xf]
      %v264 = vld [vmem:[%s215] sm:$0x1]
      %v266 = vlaneseq
      %v267 = vshrl.u32 %v266, 7
      %v268 = vsub.s32 0, %v267
      %v269 = vrot.slane %v264, %v268
      %v303 = vunpack.c.l.b16 %v226
      %v304 = vunpack.c.l.b16 %v227
      %v305 = vunpack.c.l.b16 %v228
      %v306 = vunpack.c.l.b16 %v229
      %v307 = vunpack.c.l.b16 %v230
      %v308 = vunpack.c.l.b16 %v231
      %v309 = vunpack.c.l.b16 %v232
      %v310 = vunpack.c.l.b16 %v233
      %v311 = vunpack.c.l.b16 %v234
      %v312 = vunpack.c.l.b16 %v235
      %v313 = vunpack.c.l.b16 %v236
      %v314 = vunpack.c.l.b16 %v237
      %v315 = vunpack.c.l.b16 %v238
      %v316 = vunpack.c.l.b16 %v239
      %v317 = vunpack.c.l.b16 %v240
      %v318 = vunpack.c.l.b16 %v241
      %v319 = vunpack.c.l.b16 %v242
      %v320 = vunpack.c.l.b16 %v243
      %v321 = vunpack.c.l.b16 %v244
      %v322 = vunpack.c.l.b16 %v245
      %v323 = vunpack.c.l.b16 %v246
      %v324 = vunpack.c.l.b16 %v247
      %v325 = vunpack.c.l.b16 %v248
      %v326 = vunpack.c.l.b16 %v249
      %v327 = vunpack.c.l.b16 %v250
      %v328 = vunpack.c.l.b16 %v251
      %v329 = vunpack.c.l.b16 %v252
      %v330 = vunpack.c.l.b16 %v253
      %v331 = vunpack.c.l.b16 %v254
      %v332 = vunpack.c.l.b16 %v255
      %v333 = vunpack.c.l.b16 %v256
      %v334 = vunpack.c.l.b16 %v257
      %v335 = vpack.c.b16 %v304, %v303
      %v336 = vpack.c.b16 %v306, %v305
      %v337 = vpack.c.b16 %v308, %v307
      %v338 = vpack.c.b16 %v310, %v309
      %v339 = vpack.c.b16 %v312, %v311
      %v340 = vpack.c.b16 %v314, %v313
      %v341 = vpack.c.b16 %v316, %v315
      %v342 = vpack.c.b16 %v318, %v317
      %v343 = vpack.c.b16 %v320, %v319
      %v344 = vpack.c.b16 %v322, %v321
      %v345 = vpack.c.b16 %v324, %v323
      %v346 = vpack.c.b16 %v326, %v325
      %v347 = vpack.c.b16 %v328, %v327
      %v348 = vpack.c.b16 %v330, %v329
      %v349 = vpack.c.b16 %v332, %v331
      %v350 = vpack.c.b16 %v334, %v333
      %v357 = vunpack.c.l.b16 %v258
      %v358 = vunpack.c.l.b16 %v259
      %v359 = vunpack.c.l.b16 %v260
      %v360 = vunpack.c.l.b16 %v261
      %v361 = vunpack.c.l.b16 %v262
      %v362 = vunpack.c.l.b16 %v263
      %v363 = vpack.c.b16 %v358, %v357
      %v364 = vpack.c.b16 %v360, %v359
      %v365 = vpack.c.b16 %v362, %v361
      %vm369 = vcmask 392192
      %v371 = vsel %vm369, %v335, 0
      %v374 = vsel %vm369, %v336, 0
      %v377 = vsel %vm369, %v337, 0
      %v380 = vsel %vm369, %v338, 0
      %v383 = vsel %vm369, %v339, 0
      %v386 = vsel %vm369, %v340, 0
      %v389 = vsel %vm369, %v341, 0
      %v392 = vsel %vm369, %v342, 0
      %v395 = vsel %vm369, %v343, 0
      %v398 = vsel %vm369, %v344, 0
      %v401 = vsel %vm369, %v345, 0
      %v404 = vsel %vm369, %v346, 0
      %v407 = vsel %vm369, %v347, 0
      %v410 = vsel %vm369, %v348, 0
      %v413 = vsel %vm369, %v349, 0
      %v416 = vsel %vm369, %v350, 0
      %418 = vmatprep.subr.bf16.mxu0 0
      %419 = vmatpush1.bf16.msra.mxu0 %v363
      %420 = vmatprep.subr.bf16.mxu0 0
      %421 = vmatpush1.bf16.msra.mxu0 %v364
      %422 = vmatprep.subr.bf16.mxu0 0
      %423 = vmatpush1.bf16.msra.mxu0 %v365
      %424 = vmatprep.subr.bf16.mxu0 0
      %425 = vmatpush1.bf16.msra.mxu0 0
      %426 = vmatprep.subr.bf16.mxu0 0
      %427 = vmatpush1.bf16.msra.mxu0 0
      %428 = vmatprep.subr.bf16.mxu0 0
      %429 = vmatpush1.bf16.msra.mxu0 0
      %430 = vmatprep.subr.bf16.mxu0 0
      %431 = vmatpush1.bf16.msra.mxu0 0
      %432 = vmatprep.subr.bf16.mxu0 0
      %433 = vmatpush1.bf16.msra.mxu0 0
      %434 = vmatprep.subr.bf16.mxu0 0
      %435 = vmatpush1.bf16.msra.mxu0 0
      %436 = vmatprep.subr.bf16.mxu0 0
      %437 = vmatpush1.bf16.msra.mxu0 0
      %438 = vmatprep.subr.bf16.mxu0 0
      %439 = vmatpush1.bf16.msra.mxu0 0
      %440 = vmatprep.subr.bf16.mxu0 0
      %441 = vmatpush1.bf16.msra.mxu0 0
      %442 = vmatprep.subr.bf16.mxu0 0
      %443 = vmatpush1.bf16.msra.mxu0 0
      %444 = vmatprep.subr.bf16.mxu0 0
      %445 = vmatpush1.bf16.msra.mxu0 0
      %446 = vmatprep.subr.bf16.mxu0 0
      %447 = vmatpush1.bf16.msra.mxu0 0
      %448 = vmatprep.subr.bf16.mxu0 0
      %449 = vmatpush1.bf16.msra.mxu0 0
      %450 = vmatprep.mubr.bf16.mxu0 0
      %451 = vmatmul.mubr.bf16.gmra.mrb[0].mxu0 %v371
      %v452 = vpop.f32.mrb[0].mxu0
      %v453 = vadd.f32 %v269, %v452
      %v454 = vpop.f32.mrb[0].mxu0
      %v455 = vpop.f32.mrb[0].mxu0
      %v456 = vadd.f32 %v269, %v455
      %v457 = vpop.f32.mrb[0].mxu0
      %458 = vmatprep.mubr.bf16.mxu0 0
      %459 = vmatmul.mubr.bf16.gmra.mrb[0].mxu0 %v374
      %v460 = vpop.f32.mrb[0].mxu0
      %v461 = vadd.f32 %v269, %v460
      %v462 = vpop.f32.mrb[0].mxu0
      %v463 = vpop.f32.mrb[0].mxu0
      %v464 = vadd.f32 %v269, %v463
      %v465 = vpop.f32.mrb[0].mxu0
      %466 = vmatprep.mubr.bf16.mxu0 0
      %467 = vmatmul.mubr.bf16.gmra.mrb[0].mxu0 %v377
      %v468 = vpop.f32.mrb[0].mxu0
      %v469 = vadd.f32 %v269, %v468
      %v470 = vpop.f32.mrb[0].mxu0
      %v471 = vpop.f32.mrb[0].mxu0
      %v472 = vadd.f32 %v269, %v471
      %v473 = vpop.f32.mrb[0].mxu0
      %474 = vmatprep.mubr.bf16.mxu0 0
      %475 = vmatmul.mubr.bf16.gmra.mrb[0].mxu0 %v380
      %v476 = vpop.f32.mrb[0].mxu0
      %v477 = vadd.f32 %v269, %v476
      %v478 = vpop.f32.mrb[0].mxu0
      %v479 = vpop.f32.mrb[0].mxu0
      %v480 = vadd.f32 %v269, %v479
      %v481 = vpop.f32.mrb[0].mxu0
      %482 = vmatprep.mubr.bf16.mxu0 0
      %483 = vmatmul.mubr.bf16.gmra.mrb[0].mxu0 %v383
      %v484 = vpop.f32.mrb[0].mxu0
      %v485 = vadd.f32 %v269, %v484
      %v486 = vpop.f32.mrb[0].mxu0
      %v487 = vpop.f32.mrb[0].mxu0
      %v488 = vadd.f32 %v269, %v487
      %v489 = vpop.f32.mrb[0].mxu0
      %490 = vmatprep.mubr.bf16.mxu0 0
      %491 = vmatmul.mubr.bf16.gmra.mrb[0].mxu0 %v386
      %v492 = vpop.f32.mrb[0].mxu0
      %v493 = vadd.f32 %v269, %v492
      %v494 = vpop.f32.mrb[0].mxu0
      %v495 = vpop.f32.mrb[0].mxu0
      %v496 = vadd.f32 %v269, %v495
      %v497 = vpop.f32.mrb[0].mxu0
      %498 = vmatprep.mubr.bf16.mxu0 0
      %499 = vmatmul.mubr.bf16.gmra.mrb[0].mxu0 %v389
      %v500 = vpop.f32.mrb[0].mxu0
      %v501 = vadd.f32 %v269, %v500
      %v502 = vpop.f32.mrb[0].mxu0
      %v503 = vpop.f32.mrb[0].mxu0
      %v504 = vadd.f32 %v269, %v503
      %v505 = vpop.f32.mrb[0].mxu0
      %506 = vmatprep.mubr.bf16.mxu0 0
      %507 = vmatmul.mubr.bf16.gmra.mrb[0].mxu0 %v392
      %v508 = vpop.f32.mrb[0].mxu0
      %v509 = vadd.f32 %v269, %v508
      %v510 = vpop.f32.mrb[0].mxu0
      %v511 = vpop.f32.mrb[0].mxu0
      %v512 = vadd.f32 %v269, %v511
      %v513 = vpop.f32.mrb[0].mxu0
      %514 = vmatprep.mubr.bf16.mxu0 0
      %515 = vmatmul.mubr.bf16.gmra.mrb[0].mxu0 %v395
      %v516 = vpop.f32.mrb[0].mxu0
      %v517 = vadd.f32 %v269, %v516
      %v518 = vpop.f32.mrb[0].mxu0
      %v519 = vpop.f32.mrb[0].mxu0
      %v520 = vadd.f32 %v269, %v519
      %v521 = vpop.f32.mrb[0].mxu0
      %522 = vmatprep.mubr.bf16.mxu0 0
      %523 = vmatmul.mubr.bf16.gmra.mrb[0].mxu0 %v398
      %v524 = vpop.f32.mrb[0].mxu0
      %v525 = vadd.f32 %v269, %v524
      %v526 = vpop.f32.mrb[0].mxu0
      %v527 = vpop.f32.mrb[0].mxu0
      %v528 = vadd.f32 %v269, %v527
      %v529 = vpop.f32.mrb[0].mxu0
      %530 = vmatprep.mubr.bf16.mxu0 0
      %531 = vmatmul.mubr.bf16.gmra.mrb[0].mxu0 %v401
      %v532 = vpop.f32.mrb[0].mxu0
      %v533 = vadd.f32 %v269, %v532
      %v534 = vpop.f32.mrb[0].mxu0
      %v535 = vpop.f32.mrb[0].mxu0
      %v536 = vadd.f32 %v269, %v535
      %v537 = vpop.f32.mrb[0].mxu0
      %538 = vmatprep.mubr.bf16.mxu0 0
      %539 = vmatmul.mubr.bf16.gmra.mrb[0].mxu0 %v404
      %v540 = vpop.f32.mrb[0].mxu0
      %v541 = vadd.f32 %v269, %v540
      %v542 = vpop.f32.mrb[0].mxu0
      %v543 = vpop.f32.mrb[0].mxu0
      %v544 = vadd.f32 %v269, %v543
      %v545 = vpop.f32.mrb[0].mxu0
      %546 = vmatprep.mubr.bf16.mxu0 0
      %547 = vmatmul.mubr.bf16.gmra.mrb[0].mxu0 %v407
      %v548 = vpop.f32.mrb[0].mxu0
      %v549 = vadd.f32 %v269, %v548
      %v550 = vpop.f32.mrb[0].mxu0
      %v551 = vpop.f32.mrb[0].mxu0
      %v552 = vadd.f32 %v269, %v551
      %v553 = vpop.f32.mrb[0].mxu0
      %554 = vmatprep.mubr.bf16.mxu0 0
      %555 = vmatmul.mubr.bf16.gmra.mrb[0].mxu0 %v410
      %v556 = vpop.f32.mrb[0].mxu0
      %v557 = vadd.f32 %v269, %v556
      %v558 = vpop.f32.mrb[0].mxu0
      %v559 = vpop.f32.mrb[0].mxu0
      %v560 = vadd.f32 %v269, %v559
      %v561 = vpop.f32.mrb[0].mxu0
      %562 = vmatprep.mubr.bf16.mxu0 0
      %563 = vmatmul.mubr.bf16.gmra.mrb[0].mxu0 %v413
      %v564 = vpop.f32.mrb[0].mxu0
      %v565 = vadd.f32 %v269, %v564
      %v566 = vpop.f32.mrb[0].mxu0
      %v567 = vpop.f32.mrb[0].mxu0
      %v568 = vadd.f32 %v269, %v567
      %v569 = vpop.f32.mrb[0].mxu0
      %570 = vmatprep.mubr.bf16.mxu0 0
      %571 = vmatmul.mubr.bf16.gmra.mrb[0].mxu0 %v416
      %v572 = vpop.f32.mrb[0].mxu0
      %v573 = vadd.f32 %v269, %v572
      %v574 = vpop.f32.mrb[0].mxu0
      %v575 = vpop.f32.mrb[0].mxu0
      %v576 = vadd.f32 %v269, %v575
      %v577 = vpop.f32.mrb[0].mxu0
      %578 = vdwg.mxu0
      %vm579 = vcmask 785408
      %580 = vst.msk [vmem:[%s223] sm:$0xff] %vm579, %v453
      %581 = vst.msk [vmem:[%s223 + $0x8] sm:$0xff] %vm579, %v456
      %582 = vst.msk [vmem:[%s223 + $0x10] sm:$0xff] %vm579, %v461
      %583 = vst.msk [vmem:[%s223 + $0x18] sm:$0xff] %vm579, %v464
      %584 = vst.msk [vmem:[%s223 + $0x20] sm:$0xff] %vm579, %v469
      %585 = vst.msk [vmem:[%s223 + $0x28] sm:$0xff] %vm579, %v472
      %586 = vst.msk [vmem:[%s223 + $0x30] sm:$0xff] %vm579, %v477
      %587 = vst.msk [vmem:[%s223 + $0x38] sm:$0xff] %vm579, %v480
      %588 = vst.msk [vmem:[%s223 + $0x40] sm:$0xff] %vm579, %v485
      %589 = vst.msk [vmem:[%s223 + $0x48] sm:$0xff] %vm579, %v488
      %590 = vst.msk [vmem:[%s223 + $0x50] sm:$0xff] %vm579, %v493
      %591 = vst.msk [vmem:[%s223 + $0x58] sm:$0xff] %vm579, %v496
      %592 = vst.msk [vmem:[%s223 + $0x60] sm:$0xff] %vm579, %v501
      %593 = vst.msk [vmem:[%s223 + $0x68] sm:$0xff] %vm579, %v504
      %594 = vst.msk [vmem:[%s223 + $0x70] sm:$0xff] %vm579, %v509
      %595 = vst.msk [vmem:[%s223 + $0x78] sm:$0xff] %vm579, %v512
      %596 = vst.msk [vmem:[%s223 + $0x80] sm:$0xff] %vm579, %v517
      %597 = vst.msk [vmem:[%s223 + $0x88] sm:$0xff] %vm579, %v520
      %598 = vst.msk [vmem:[%s223 + $0x90] sm:$0xff] %vm579, %v525
      %599 = vst.msk [vmem:[%s223 + $0x98] sm:$0xff] %vm579, %v528
      %600 = vst.msk [vmem:[%s223 + $0xa0] sm:$0xff] %vm579, %v533
      %601 = vst.msk [vmem:[%s223 + $0xa8] sm:$0xff] %vm579, %v536
      %602 = vst.msk [vmem:[%s223 + $0xb0] sm:$0xff] %vm579, %v541
      %603 = vst.msk [vmem:[%s223 + $0xb8] sm:$0xff] %vm579, %v544
      %604 = vst.msk [vmem:[%s223 + $0xc0] sm:$0xff] %vm579, %v549
      %605 = vst.msk [vmem:[%s223 + $0xc8] sm:$0xff] %vm579, %v552
      %606 = vst.msk [vmem:[%s223 + $0xd0] sm:$0xff] %vm579, %v557
      %607 = vst.msk [vmem:[%s223 + $0xd8] sm:$0xff] %vm579, %v560
      %608 = vst.msk [vmem:[%s223 + $0xe0] sm:$0xff] %vm579, %v565
      %609 = vst.msk [vmem:[%s223 + $0xe8] sm:$0xff] %vm579, %v568
      %610 = vst.msk [vmem:[%s223 + $0xf0] sm:$0xff] %vm579, %v573
      %611 = vst.msk [vmem:[%s223 + $0xf8] sm:$0xff] %vm579, %v576
      %s612 = smul.u32 32, %s18
      %p613 = scmp.lt.s32.totalorder %s612, 63
      %s614 = scalar_select %p613, %s612, 63
      %p615 = scmp.lt.s32.totalorder %s19, 0
      %s616 = scalar_select %p615, %s19, 0
      %s617 = sadd.s32 %s616, %s614
      %s618 = smul.addr %s617, 8
      %s619 = scalar_lea.vmem %s3, %s618
      // Predicated region
      $region33: #{pallas_matmul.1} parent=31 // pred_check
        %p620 = pneg %p124
      $region34: #{pallas_matmul.1} parent=31 // pred_check_branch
        %622 = sbr.rel (%p620) target = $region36
      $region35: #{pallas_matmul.1} parent=31 // pred_region
        %s623 = smul.u32 32, %s18
      $region36: #{pallas_matmul.1} parent=31 // pred_fallthru
        _
    $region32: #{pallas_matmul.1} parent=5 // pred_fallthru
      _
    %p624 = scmp.le.s32.totalorder 2, %s9
    // Predicated region
    $region37: #{pallas_matmul.1} parent=5 // pred_check
      %p625 = pneg %p624
    $region38: #{pallas_matmul.1} parent=5 // pred_check_branch
      %627 = sbr.rel (%p625) target = $region40
    $region39: #{pallas_matmul.1} parent=5 // pred_region
      %s628 = ssub.s32 %s9, 2
      // Predicated region
      $region41: #{pallas_matmul.1} parent=39 // pred_check
        %p629 = pneg %p130
      $region42: #{pallas_matmul.1} parent=39 // pred_check_branch
        %631 = sbr.rel (%p629) target = $region44
      $region43: #{pallas_matmul.1} parent=39 // pred_region
        %s632 = smul.u32 32, %s20
        %p633 = scmp.lt.s32.totalorder %s632, 63
        %s634 = scalar_select %p633, %s632, 63
        %p635 = scmp.lt.s32.totalorder %s21, 0
        %s636 = scalar_select %p635, %s21, 0
        %s637 = sadd.s32 %s636, %s634
        %s638 = smul.addr %s637, 8
        %s639 = scalar_lea.vmem %s3, %s638
      $region44: #{pallas_matmul.1} parent=39 // pred_fallthru
        _
    $region40: #{pallas_matmul.1} parent=5 // pred_fallthru
      _
  $region6: #{pallas_matmul.1} parent=0 // loop_footer
    %s13 = sadd.s32 1, %s9
  $region7: #{pallas_matmul.1} parent=0 // loop_footer_branch
    %8 = sbr.rel target = $region3
  $region8: #{pallas_matmul.1} parent=0 // loop_exit
    _

</llo_original>
